<compile_context>
chip_gen: v7x
topology: tpu7x:2x2x1
jax: 0.10.0
libtpu: 0.0.40
codegen_flags: <defaults>
</compile_context>

<pallas_src>
import jax
import jax.numpy as jnp
import numpy as np
from jax.experimental import pallas as pl
from jax.experimental.pallas import tpu as pltpu


def _round_up(x, m):
    return ((x + m - 1) // m) * m


# ----------------------------------------------------------------------------
# Kernel 1: init_hidden_state  (mean over pixels + fused init_h/init_c linear)
# ----------------------------------------------------------------------------
def _init_state_kernel(enc_ref, w_ref, b_ref, h_ref, c_ref):
    # enc_ref: (TB, num_pixels, enc_dim) f32
    # w_ref:   (enc_dim, 2*Hp) bf16 (fused [W_h | W_c]); b_ref: (1, 2*Hp) f32
    mean_enc = jnp.mean(enc_ref[...], axis=1).astype(jnp.bfloat16)  # (TB, enc)
    hc = (
        jnp.dot(mean_enc, w_ref[...], preferred_element_type=jnp.float32)
        + b_ref[...]
    )  # (TB, 2*Hp)
    hp = h_ref.shape[-1]
    h_ref[...] = hc[:, :hp]
    c_ref[...] = hc[:, hp:]


def init_hidden_state_pallas(encoder_out_p, w_init, b_init, hp):
    bs_pad, num_pix, enc_dim = encoder_out_p.shape
    tb = 8
    grid = (bs_pad // tb,)
    grid_spec = pltpu.PrefetchScalarGridSpec(
        num_scalar_prefetch=0,
        grid=grid,
        in_specs=[
            pl.BlockSpec((tb, num_pix, enc_dim), lambda b: (b, 0, 0)),
            pl.BlockSpec((enc_dim, 2 * hp), lambda b: (0, 0)),
            pl.BlockSpec((1, 2 * hp), lambda b: (0, 0)),
        ],
        out_specs=[
            pl.BlockSpec((tb, hp), lambda b: (b, 0)),
            pl.BlockSpec((tb, hp), lambda b: (b, 0)),
        ],
    )
    return pl.pallas_call(
        _init_state_kernel,
        out_shape=(
            jax.ShapeDtypeStruct((bs_pad, hp), jnp.float32),
            jax.ShapeDtypeStruct((bs_pad, hp), jnp.float32),
        ),
        grid_spec=grid_spec,
        compiler_params=pltpu.CompilerParams(
            dimension_semantics=("parallel",)),
    )(encoder_out_p, w_init, b_init)


# ----------------------------------------------------------------------------
# Kernel 2: recurrent LSTM steps (time-blocked), emits hidden states only
# ----------------------------------------------------------------------------
def _decode_step_kernel(lens_ref, emb_ref, h0_ref, c0_ref, wg_ref, bg_ref,
                        hout_ref, h_sc, c_sc):
    # lens_ref: (bs, 1) int32 decode lengths (0 for padded rows)
    # emb_ref:  (TK, bs, Ep) bf16 embeddings for this time block
    # wg_ref:   (Ep+Hp, 4*Hp) bf16 fused [W_ih^T; W_hh^T], gate order i,f,g,o
    # bg_ref:   (1, 4*Hp) f32  (b_ih + b_hh)
    # hout_ref: (TK, bs, Hp) bf16 hidden states for this block
    blk = pl.program_id(0)

    @pl.when(blk == 0)
    def _():
        h_sc[...] = h0_ref[...]
        c_sc[...] = c0_ref[...]

    hp = h_sc.shape[-1]
    tk = emb_ref.shape[0]
    for k in range(tk):  # static unroll over the time block
        t = blk * tk + k
        x = emb_ref[k]                                        # (bs, Ep) bf16
        xh = jnp.concatenate(
            [x, h_sc[...].astype(jnp.bfloat16)], axis=-1)     # (bs, Ep+Hp)
        gates = (
            jnp.dot(xh, wg_ref[...], preferred_element_type=jnp.float32)
            + bg_ref[...]
        )  # (bs, 4*Hp), lane-aligned gate slices (Hp multiple of 128)
        i_g = jax.nn.sigmoid(gates[:, 0 * hp:1 * hp])
        f_g = jax.nn.sigmoid(gates[:, 1 * hp:2 * hp])
        g_g = jnp.tanh(gates[:, 2 * hp:3 * hp])
        o_g = jax.nn.sigmoid(gates[:, 3 * hp:4 * hp])

        c_new = f_g * c_sc[...] + i_g * g_g
        h_new = o_g * jnp.tanh(c_new)

        mask = lens_ref[...] > t  # (bs, 1): row still being decoded at step t
        h_sc[...] = jnp.where(mask, h_new, h_sc[...])
        c_sc[...] = jnp.where(mask, c_new, c_sc[...])

        # Inactive rows are masked later in the fc pass; write h_new as-is.
        hout_ref[k] = h_new.astype(jnp.bfloat16)


def decode_loop_pallas(lens2d, emb_t, h0, c0, w_gate, b_gate, time_block):
    t_pad, bs_pad, ep = emb_t.shape
    hp = h0.shape[-1]
    tk = time_block
    grid = (t_pad // tk,)
    grid_spec = pltpu.PrefetchScalarGridSpec(
        num_scalar_prefetch=0,
        grid=grid,
        in_specs=[
            pl.BlockSpec((bs_pad, 1), lambda i: (0, 0)),          # lens
            pl.BlockSpec((tk, bs_pad, ep), lambda i: (i, 0, 0)),  # embeddings
            pl.BlockSpec((bs_pad, hp), lambda i: (0, 0)),         # h0
            pl.BlockSpec((bs_pad, hp), lambda i: (0, 0)),         # c0
            pl.BlockSpec((ep + hp, 4 * hp), lambda i: (0, 0)),    # fused W
            pl.BlockSpec((1, 4 * hp), lambda i: (0, 0)),          # gate bias
        ],
        out_specs=pl.BlockSpec((tk, bs_pad, hp), lambda i: (i, 0, 0)),
        scratch_shapes=[
            pltpu.VMEM((bs_pad, hp), jnp.float32),
            pltpu.VMEM((bs_pad, hp), jnp.float32),
        ],
    )
    return pl.pallas_call(
        _decode_step_kernel,
        out_shape=jax.ShapeDtypeStruct((t_pad, bs_pad, hp), jnp.bfloat16),
        grid_spec=grid_spec,
        compiler_params=pltpu.CompilerParams(
            dimension_semantics=("arbitrary",)),
    )(lens2d, emb_t, h0, c0, w_gate, b_gate)


# ----------------------------------------------------------------------------
# Kernel 3: batched vocab projection (hoisted fc), output directly (bs, T, V)
# ----------------------------------------------------------------------------
def _fc_kernel(lens_ref, h_ref, wfc_ref, bfc_ref, out_ref):
    # h_ref: (bs, TF, Hp) bf16; wfc_ref: (Hp, Vp) bf16; bfc_ref: (1, Vp) f32
    bs, tf, hp = h_ref.shape
    h2 = h_ref[...].reshape(bs * tf, hp)
    logits = (
        jnp.dot(h2, wfc_ref[...], preferred_element_type=jnp.float32)
        + bfc_ref[...]
    )  # (bs*TF, Vp)
    logits = logits.reshape(bs, tf, -1)

    t_base = pl.program_id(0) * tf
    t_idx = jax.lax.broadcasted_iota(jnp.int32, (bs, tf, 1), 1) + t_base
    mask = lens_ref[...][:, :, None] > t_idx  # (bs, TF, 1)
    out_ref[...] = jnp.where(mask, logits, 0.0)


def fc_project_pallas(lens2d, h_bt, w_fc, b_fc):
    bs_pad, t_pad, hp = h_bt.shape
    vp = w_fc.shape[1]
    tf = t_pad  # TODO(synk): tile over time/vocab for production-scale T, V.
    grid = (t_pad // tf,)
    grid_spec = pltpu.PrefetchScalarGridSpec(
        num_scalar_prefetch=0,
        grid=grid,
        in_specs=[
            pl.BlockSpec((bs_pad, 1), lambda i: (0, 0)),
            pl.BlockSpec((bs_pad, tf, hp), lambda i: (0, i, 0)),
            pl.BlockSpec((hp, vp), lambda i: (0, 0)),
            pl.BlockSpec((1, vp), lambda i: (0, 0)),
        ],
        out_specs=pl.BlockSpec((bs_pad, tf, vp), lambda i: (0, i, 0)),
    )
    return pl.pallas_call(
        _fc_kernel,
        out_shape=jax.ShapeDtypeStruct((bs_pad, t_pad, vp), jnp.float32),
        grid_spec=grid_spec,
        compiler_params=pltpu.CompilerParams(
            dimension_semantics=("parallel",)),
    )(lens2d, h_bt, w_fc, b_fc)


# ----------------------------------------------------------------------------
# Full forward (glue in plain JAX: sort, embedding lookup, padding, fusion)
# ----------------------------------------------------------------------------
def decoder_forward(params, encoder_out, encoded_captions, caption_lens,
                    time_block=4):
    bs = encoder_out.shape[0]
    enc_dim = encoder_out.shape[-1]
    encoder_out = encoder_out.reshape(bs, -1, enc_dim)

    lens = caption_lens[:, 0]
    sort_idx = jnp.argsort(-lens)            # stable descending sort
    lens_sorted = lens[sort_idx]
    encoder_out = encoder_out[sort_idx]
    caps_sorted = encoded_captions[sort_idx]
    decode_lens = lens_sorted - 1

    e_dim = params["embedding"].shape[1]
    h_dim = params["init_h_w"].shape[1]
    v_dim = params["fc_w_t"].shape[1]
    max_len = caps_sorted.shape[1]

    # Static, hardware-friendly padded sizes.
    bs_pad = _round_up(bs, 8)
    ep = _round_up(e_dim, 128)
    hp = _round_up(h_dim, 128)
    vp = _round_up(v_dim, 128)
    t_static = max_len - 1                   # static upper bound on decode T
    tk = time_block
    t_pad = _round_up(t_static, max(tk, 8))
    assert t_pad % tk == 0

    f32, bf16 = jnp.float32, jnp.bfloat16

    # ---- fuse + pad + cast parameters (const-folded under jit) -------------
    def pad_gate_cols(w):                    # (K, 4H) -> (K, 4Hp) per-gate pad
        k = w.shape[0]
        w4 = w.reshape(k, 4, h_dim)
        return jnp.pad(w4, ((0, 0), (0, 0), (0, hp - h_dim))).reshape(k, 4 * hp)

    w_ih_p = jnp.pad(pad_gate_cols(params["w_ih_t"]), ((0, ep - e_dim), (0, 0)))
    w_hh_p = jnp.pad(pad_gate_cols(params["w_hh_t"]), ((0, hp - h_dim), (0, 0)))
    w_gate = jnp.concatenate([w_ih_p, w_hh_p], axis=0).astype(bf16)
    b_gate = pad_gate_cols(params["b_gates"]).astype(f32)

    w_init = jnp.concatenate(
        [jnp.pad(params["init_h_w"], ((0, 0), (0, hp - h_dim))),
         jnp.pad(params["init_c_w"], ((0, 0), (0, hp - h_dim)))],
        axis=1).astype(bf16)
    b_init = jnp.concatenate(
        [jnp.pad(params["init_h_b"], ((0, 0), (0, hp - h_dim))),
         jnp.pad(params["init_c_b"], ((0, 0), (0, hp - h_dim)))],
        axis=1).astype(f32)

    w_fc = jnp.pad(params["fc_w_t"],
                   ((0, hp - h_dim), (0, vp - v_dim))).astype(bf16)
    b_fc = jnp.pad(params["fc_b"], ((0, 0), (0, vp - v_dim))).astype(f32)

    emb_tbl = jnp.pad(params["embedding"], ((0, 0), (0, ep - e_dim))).astype(bf16)

    # ---- padded activations -------------------------------------------------
    enc_p = jnp.pad(encoder_out, ((0, bs_pad - bs), (0, 0), (0, 0))).astype(f32)
    lens2d = jnp.pad(decode_lens.astype(jnp.int32),
                     (0, bs_pad - bs))[:, None]              # (bs_pad, 1)

    emb = emb_tbl[caps_sorted][:, :t_static, :]              # (bs, T, Ep) bf16
    emb = jnp.pad(emb, ((0, bs_pad - bs), (0, t_pad - t_static), (0, 0)))
    emb_t = jnp.transpose(emb, (1, 0, 2))                    # (T_pad, bs_pad, Ep)

    # 1) initial LSTM state (fused init_h / init_c)
    h0, c0 = init_hidden_state_pallas(enc_p, w_init, b_init, hp)

    # 2) recurrent LSTM steps -> hidden states (time-major, bf16)
    h_t = decode_loop_pallas(lens2d, emb_t, h0, c0, w_gate, b_gate, tk)

    # 3) batched vocab projection; output written directly in (bs, T, V).
    #    (Transposing h here is cheap: it is the small tensor, not the preds.)
    h_bt = jnp.transpose(h_t, (1, 0, 2))                     # (bs_pad, T_pad, Hp)
    preds_full = fc_project_pallas(lens2d, h_bt, w_fc, b_fc)

    # Interface-fidelity slice to max(decode_lens). Kernels above are compiled
    # for the static T_pad; this host sync only shapes the returned view.
    t_max = int(jnp.max(decode_lens))
    predictions = preds_full[:bs, :t_max, :v_dim]
    return predictions, caps_sorted, decode_lens, sort_idx


# ----------------------------------------------------------------------------
# Numpy reference mirroring the PyTorch loop semantics (with the same bf16
# rounding of matmul inputs + f32 accumulation used by the kernels).
# ----------------------------------------------------------------------------
def _bf16(x):
    return np.asarray(jnp.asarray(np.asarray(x), jnp.bfloat16).astype(jnp.float32))


def reference_forward(params_np, encoder_out, encoded_captions, caption_lens):
    enc = np.asarray(encoder_out, np.float32)
    caps = np.asarray(encoded_captions)
    lens = np.asarray(caption_lens)[:, 0]
    bs = enc.shape[0]

    sort_idx = np.argsort(-lens, kind="stable")
    lens = lens[sort_idx]
    enc = enc[sort_idx]
    caps = caps[sort_idx]

    emb = _bf16(params_np["embedding"])[caps]                # (bs, L, E)
    mean_enc = enc.mean(axis=1, dtype=np.float32)
    h = _bf16(mean_enc) @ _bf16(params_np["init_h_w"]) + params_np["init_h_b"][0]
    c = _bf16(mean_enc) @ _bf16(params_np["init_c_w"]) + params_np["init_c_b"][0]

    w_ih = _bf16(params_np["w_ih_t"])
    w_hh = _bf16(params_np["w_hh_t"])
    w_fc = _bf16(params_np["fc_w_t"])
    b_g = params_np["b_gates"][0]
    b_fc = params_np["fc_b"][0]

    decode_lens = lens - 1
    T = int(decode_lens.max())
    V = params_np["fc_w_t"].shape[1]
    Hd = h.shape[1]
    preds_out = np.zeros((bs, T, V), dtype=np.float32)

    def sig(x):
        return 1.0 / (1.0 + np.exp(-x))

    for t in range(T):
        bs_t = int(np.sum(decode_lens > t))
        x = emb[:bs_t, t, :]
        gates = x @ w_ih + _bf16(h[:bs_t]) @ w_hh + b_g
        i_g = sig(gates[:, 0 * Hd:1 * Hd])
        f_g = sig(gates[:, 1 * Hd:2 * Hd])
        g_g = np.tanh(gates[:, 2 * Hd:3 * Hd])
        o_g = sig(gates[:, 3 * Hd:4 * Hd])
        c = f_g * c[:bs_t] + i_g * g_g
        h = o_g * np.tanh(c)
        preds_out[:bs_t, t, :] = _bf16(h) @ w_fc + b_fc
    return preds_out, decode_lens, sort_idx


# ----------------------------------------------------------------------------
if __name__ == "__main__":
    # Small, TPU-friendly shapes (encoder_dim shrunk from 2048).
    BS, NUM_PIXELS, ENC_DIM = 4, 16, 64
    EMBED_DIM, DEC_DIM, VOCAB = 32, 32, 128
    MAX_CAP_LEN = 8

    key = jax.random.PRNGKey(0)
    ks = jax.random.split(key, 12)

    params = {
        "embedding": 0.1 * jax.random.normal(ks[0], (VOCAB, EMBED_DIM), jnp.float32),
        "init_h_w": 0.1 * jax.random.normal(ks[1], (ENC_DIM, DEC_DIM), jnp.float32),
        "init_h_b": 0.1 * jax.random.normal(ks[2], (1, DEC_DIM), jnp.float32),
        "init_c_w": 0.1 * jax.random.normal(ks[3], (ENC_DIM, DEC_DIM), jnp.float32),
        "init_c_b": 0.1 * jax.random.normal(ks[4], (1, DEC_DIM), jnp.float32),
        # LSTMCell params pre-transposed to (in, 4H) / (H, 4H); gate order
        # i,f,g,o as in PyTorch; b_gates = b_ih + b_hh.
        "w_ih_t": 0.1 * jax.random.normal(ks[5], (EMBED_DIM, 4 * DEC_DIM), jnp.float32),
        "w_hh_t": 0.1 * jax.random.normal(ks[6], (DEC_DIM, 4 * DEC_DIM), jnp.float32),
        "b_gates": 0.1 * jax.random.normal(ks[7], (1, 4 * DEC_DIM), jnp.float32),
        "fc_w_t": 0.1 * jax.random.normal(ks[8], (DEC_DIM, VOCAB), jnp.float32),
        "fc_b": 0.1 * jax.random.normal(ks[9], (1, VOCAB), jnp.float32),
    }

    encoder_out = jax.random.normal(ks[10], (BS, NUM_PIXELS, ENC_DIM), jnp.float32)
    encoded_captions = jax.random.randint(
        ks[11], (BS, MAX_CAP_LEN), 0, VOCAB, dtype=jnp.int32)
    caption_lens = jnp.array([[6], [8], [3], [7]], dtype=jnp.int32)

    predictions, caps_sorted, decode_lens, sort_idx = decoder_forward(
        params, encoder_out, encoded_captions, caption_lens)
    jax.block_until_ready(predictions)

    # Validate against a numpy reference of the exact loop semantics (with the
    # same bf16-input / f32-accumulation matmuls the kernels use).
    params_np = {k: np.asarray(v) for k, v in params.items()}
    ref_preds, ref_dec_lens, ref_sort_idx = reference_forward(
        params_np, encoder_out, encoded_captions, caption_lens)

    np.testing.assert_allclose(np.asarray(predictions), ref_preds,
                               rtol=2e-2, atol=2e-3)
    np.testing.assert_array_equal(np.asarray(decode_lens), ref_dec_lens)
    np.testing.assert_array_equal(np.asarray(sort_idx), ref_sort_idx)

    print("KERNEL_OK")
</pallas_src>

<mosaic_0001>
module attributes {stable_mosaic.version = 11 : i64} {
  func.func @_init_state_kernel(%arg0: i32, %arg1: memref<8x16x64xf32, #tpu.memory_space<vmem>>, %arg2: memref<64x256xbf16, #tpu.memory_space<vmem>>, %arg3: memref<1x256xf32, #tpu.memory_space<vmem>>, %arg4: memref<8x128xf32, #tpu.memory_space<vmem>>, %arg5: memref<8x128xf32, #tpu.memory_space<vmem>>) attributes {dimension_semantics = [#tpu.dimension_semantics<parallel>], iteration_bounds = array<i64: 1>, scalar_prefetch = 0 : i64, scratch_operands = 0 : i64, tpu.core_type = #tpu.core_type<tc>, window_params = [{transform_indices = @transform_0, window_bounds = array<i64: 8, 16, 64>}, {pipeline_mode = #tpu.pipeline_mode<synchronous>, transform_indices = @transform_1, window_bounds = array<i64: 64, 256>}, {pipeline_mode = #tpu.pipeline_mode<synchronous>, transform_indices = @transform_2, window_bounds = array<i64: 1, 256>}, {transform_indices = @transform_3, window_bounds = array<i64: 8, 128>}, {transform_indices = @transform_4, window_bounds = array<i64: 8, 128>}]} {
    %c0 = arith.constant 0 : index
    %c0_0 = arith.constant 0 : index
    %c0_1 = arith.constant 0 : index
    %0 = vector.load %arg1[%c0, %c0_0, %c0_1] : memref<8x16x64xf32, #tpu.memory_space<vmem>>, vector<8x16x64xf32>
    %cst = arith.constant dense<0.000000e+00> : vector<8x64xf32>
    %1 = vector.multi_reduction <add>, %0, %cst [1] : vector<8x16x64xf32> to vector<8x64xf32>
    %cst_2 = arith.constant 1.600000e+01 : f32
    %2 = vector.broadcast %cst_2 : f32 to vector<8x64xf32>
    %3 = arith.divf %1, %2 : vector<8x64xf32>
    %4 = arith.truncf %3 : vector<8x64xf32> to vector<8x64xbf16>
    %c0_3 = arith.constant 0 : index
    %c0_4 = arith.constant 0 : index
    %5 = vector.load %arg2[%c0_3, %c0_4] : memref<64x256xbf16, #tpu.memory_space<vmem>>, vector<64x256xbf16>
    %cst_5 = arith.constant dense<0.000000e+00> : vector<8x256xf32>
    %6 = tpu.matmul %4, %5, %cst_5 {dimension_numbers = #tpu.dot_dimension_numbers<[1], [0], [0], [1], [0, 0, 1, 1], [], []>} : vector<8x64xbf16>, vector<64x256xbf16>, vector<8x256xf32> -> vector<8x256xf32>
    %c0_6 = arith.constant 0 : index
    %c0_7 = arith.constant 0 : index
    %7 = vector.load %arg3[%c0_6, %c0_7] : memref<1x256xf32, #tpu.memory_space<vmem>>, vector<1x256xf32>
    %8 = vector.broadcast %7 : vector<1x256xf32> to vector<8x256xf32>
    %9 = arith.addf %6, %8 : vector<8x256xf32>
    %10 = vector.extract_strided_slice %9 {offsets = [0, 0], sizes = [8, 128], strides = [1, 1]} : vector<8x256xf32> to vector<8x128xf32>
    %c0_8 = arith.constant 0 : index
    %c0_9 = arith.constant 0 : index
    %11 = vector.load %arg4[%c0_8, %c0_9] : memref<8x128xf32, #tpu.memory_space<vmem>>, vector<8x128xf32>
    tpu.vector_store %arg4[%c0_8, %c0_9], %10 {strides = array<i32>} : memref<8x128xf32, #tpu.memory_space<vmem>>, vector<8x128xf32>,
    %12 = vector.extract_strided_slice %9 {offsets = [0, 128], sizes = [8, 128], strides = [1, 1]} : vector<8x256xf32> to vector<8x128xf32>
    %c0_10 = arith.constant 0 : index
    %c0_11 = arith.constant 0 : index
    %13 = vector.load %arg5[%c0_10, %c0_11] : memref<8x128xf32, #tpu.memory_space<vmem>>, vector<8x128xf32>
    tpu.vector_store %arg5[%c0_10, %c0_11], %12 {strides = array<i32>} : memref<8x128xf32, #tpu.memory_space<vmem>>, vector<8x128xf32>,
    return
  }
  func.func @transform_0(%arg0: i32) -> (i32, i32, i32) {
    %c0_i32 = arith.constant 0 : i32
    %c0_i32_0 = arith.constant 0 : i32
    %c0_i32_1 = arith.constant 0 : i32
    return %arg0, %c0_i32, %c0_i32_0 : i32, i32, i32
  }
  func.func @transform_1(%arg0: i32) -> (i32, i32) {
    %c0_i32 = arith.constant 0 : i32
    %c0_i32_0 = arith.constant 0 : i32
    %c0_i32_1 = arith.constant 0 : i32
    return %c0_i32, %c0_i32_0 : i32, i32
  }
  func.func @transform_2(%arg0: i32) -> (i32, i32) {
    %c0_i32 = arith.constant 0 : i32
    %c0_i32_0 = arith.constant 0 : i32
    %c0_i32_1 = arith.constant 0 : i32
    return %c0_i32, %c0_i32_0 : i32, i32
  }
  func.func @transform_3(%arg0: i32) -> (i32, i32) {
    %c0_i32 = arith.constant 0 : i32
    %c0_i32_0 = arith.constant 0 : i32
    return %arg0, %c0_i32 : i32, i32
  }
  func.func @transform_4(%arg0: i32) -> (i32, i32) {
    %c0_i32 = arith.constant 0 : i32
    %c0_i32_0 = arith.constant 0 : i32
    return %arg0, %c0_i32 : i32, i32
  }
}

</mosaic_0001>

<llo_original>
// kernel: tpu_custom_call.1
$region0: #{tpu_custom_call.1}
  #allocation0 [shape = 'u32[]', space=smem, size = 0x4, offset = 0x4, fixed_abs, tag = 'smem constant byte address 0x4 - core index']
  #allocation1 [shape = 'u32[144,128]{1,0:T(1,128)}', space=vmem, size = 0x12000, scoped, tag = 'internal scratch']
  %s0 = inlined_call_operand.hbm [shape: f32[8,16,64], index: 0, kind: input, shape index: {}]
  %s1 = inlined_call_operand.hbm [shape: bf16[64,256], index: 1, kind: input, shape index: {}]
  %s2 = inlined_call_operand.vmem [shape: f32[1,256], index: 2, kind: input, shape index: {}]
  %s3 = inlined_call_operand.hbm [shape: f32[8,128], index: 3, kind: output, shape index: {0}]
  %s4 = inlined_call_operand.hbm [shape: f32[8,128], index: 4, kind: output, shape index: {1}]
  %5 = xla_tuple %s3, %s4
  %s6 = sld [smem:[#allocation0]]
  $region38: #{tpu_custom_call.1} parent=0
    _
  %s8 = ssub.s32 1, %s6
  %s9 = scalar_select 0, %s8, %s6
  $region1: #{tpu_custom_call.1} parent=0
    #allocation2 [shape = 'u8[65536]{0}', space=vmem, size = 0x10000, scoped, tag = 'input window, operand 0, single buffered']
    #allocation3 [shape = 's32[1]{0}', space=sflag, size = 0x4, scoped, tag = 'scoped memory for tpu_custom_call.1']
    #allocation4 [shape = 's32[1]{0}', space=sflag, size = 0x4, scoped, tag = 'scoped memory for tpu_custom_call.1']
    #allocation5 [shape = 'u8[32768]{0}', space=vmem, size = 0x8000, scoped, tag = 'input window, operand 1, single buffered']
    #allocation6 [shape = 's32[1]{0}', space=sflag, size = 0x4, scoped, tag = 'scoped memory for tpu_custom_call.1']
    #allocation7 [shape = 'u8[4096]{0}', space=vmem, size = 0x1000, scoped, tag = 'output window, operand 0, single buffered']
    #allocation8 [shape = 'u8[4096]{0}', space=vmem, size = 0x1000, scoped, tag = 'output window, operand 1, single buffered']
    #allocation9 [shape = 's32[1]{0}', space=sflag, size = 0x4, scoped, tag = 'scoped memory for tpu_custom_call.1']
    %10 = vsyncpa [#allocation3], 0
    %11 = vsyncpa [#allocation6], 0
    %12 = vsyncpa [#allocation4], 0
    %13 = vsyncpa [#allocation9], 0
    // Predicated region
    $region2: #{tpu_custom_call.1} parent=1 // pred_check
      _
    $region3: #{tpu_custom_call.1} parent=1 // pred_check_branch
      %15 = sbr.rel (0) target = $region5
    $region4: #{tpu_custom_call.1} parent=1 // pred_region
      %s17 = ssub.s32 2048, 2048
      %18 = vsyncadd [#allocation3], %s17
      %s19 = sshll.u32 [#allocation2], 4
      %s20 = int_to_ptr.vmem [resolvable:$true] %s19
      %25 = dma.hbm_to_vmem [thread:$0]  %s0, 2048, %s20, [#allocation3], 128, 128, 8
    $region5: #{tpu_custom_call.1} parent=1 // pred_fallthru
      _
    // Predicated region
    $region6: #{tpu_custom_call.1} parent=1 // pred_check
      _
    $region7: #{tpu_custom_call.1} parent=1 // pred_check_branch
      %27 = sbr.rel (0) target = $region9
    $region8: #{tpu_custom_call.1} parent=1 // pred_region
      %s29 = ssub.s32 1024, 1024
      %30 = vsyncadd [#allocation6], %s29
      %s31 = sshll.u32 [#allocation5], 4
      %s32 = int_to_ptr.vmem [resolvable:$true] %s31
      %37 = dma.hbm_to_vmem [thread:$0]  %s1, 1024, %s32, [#allocation6], 128, 128, 8
    $region9: #{tpu_custom_call.1} parent=1 // pred_fallthru
      _
    // Predicated region
    $region10: #{tpu_custom_call.1} parent=1 // pred_check
      _
    $region11: #{tpu_custom_call.1} parent=1 // pred_check_branch
      %39 = sbr.rel (0) target = $region13
    $region12: #{tpu_custom_call.1} parent=1 // pred_region
      _
    $region13: #{tpu_custom_call.1} parent=1 // pred_fallthru
      _
    // Predicated region
    $region14: #{tpu_custom_call.1} parent=1 // pred_check
      _
    $region15: #{tpu_custom_call.1} parent=1 // pred_check_branch
      %41 = sbr.rel (0) target = $region17
    $region16: #{tpu_custom_call.1} parent=1 // pred_region
      %42 = dma.done [#allocation3], 2048
    $region17: #{tpu_custom_call.1} parent=1 // pred_fallthru
      _
    // Predicated region
    $region18: #{tpu_custom_call.1} parent=1 // pred_check
      _
    $region19: #{tpu_custom_call.1} parent=1 // pred_check_branch
      %44 = sbr.rel (0) target = $region21
    $region20: #{tpu_custom_call.1} parent=1 // pred_region
      %45 = dma.done [#allocation6], 1024
    $region21: #{tpu_custom_call.1} parent=1 // pred_fallthru
      _
    %v47 = vld [vmem:[#allocation2] sm:$0xff]
    %v48 = vld [vmem:[#allocation2 + $0x8] sm:$0xff]
    %v49 = vld [vmem:[#allocation2 + $0x10] sm:$0xff]
    %v50 = vld [vmem:[#allocation2 + $0x18] sm:$0xff]
    %v51 = vld [vmem:[#allocation2 + $0x20] sm:$0xff]
    %v52 = vld [vmem:[#allocation2 + $0x28] sm:$0xff]
    %v53 = vld [vmem:[#allocation2 + $0x30] sm:$0xff]
    %v54 = vld [vmem:[#allocation2 + $0x38] sm:$0xff]
    %v55 = vld [vmem:[#allocation2 + $0x40] sm:$0xff]
    %v56 = vld [vmem:[#allocation2 + $0x48] sm:$0xff]
    %v57 = vld [vmem:[#allocation2 + $0x50] sm:$0xff]
    %v58 = vld [vmem:[#allocation2 + $0x58] sm:$0xff]
    %v59 = vld [vmem:[#allocation2 + $0x60] sm:$0xff]
    %v60 = vld [vmem:[#allocation2 + $0x68] sm:$0xff]
    %v61 = vld [vmem:[#allocation2 + $0x70] sm:$0xff]
    %v62 = vld [vmem:[#allocation2 + $0x78] sm:$0xff]
    %vm63 = vcmask 523264
    %v64 = vsel %vm63, %v47, 0.0
    %v65 = vsel %vm63, %v48, 0.0
    %v66 = vadd.f32 %v64, %v65
    %v67 = vrot.slane %v66, 4
    %v68 = vadd.f32 %v66, %v67
    %v69 = vrot.slane %v68, 2
    %v70 = vadd.f32 %v68, %v69
    %v71 = vrot.slane %v70, 1
    %v72 = vadd.f32 %v70, %v71
    %v73 = vsel %vm63, %v49, 0.0
    %v74 = vsel %vm63, %v50, 0.0
    %v75 = vadd.f32 %v73, %v74
    %v76 = vrot.slane %v75, 4
    %v77 = vadd.f32 %v75, %v76
    %v78 = vrot.slane %v77, 2
    %v79 = vadd.f32 %v77, %v78
    %v80 = vrot.slane %v79, 1
    %v81 = vadd.f32 %v79, %v80
    %v82 = vsel %vm63, %v51, 0.0
    %v83 = vsel %vm63, %v52, 0.0
    %v84 = vadd.f32 %v82, %v83
    %v85 = vrot.slane %v84, 4
    %v86 = vadd.f32 %v84, %v85
    %v87 = vrot.slane %v86, 2
    %v88 = vadd.f32 %v86, %v87
    %v89 = vrot.slane %v88, 1
    %v90 = vadd.f32 %v88, %v89
    %v91 = vsel %vm63, %v53, 0.0
    %v92 = vsel %vm63, %v54, 0.0
    %v93 = vadd.f32 %v91, %v92
    %v94 = vrot.slane %v93, 4
    %v95 = vadd.f32 %v93, %v94
    %v96 = vrot.slane %v95, 2
    %v97 = vadd.f32 %v95, %v96
    %v98 = vrot.slane %v97, 1
    %v99 = vadd.f32 %v97, %v98
    %v100 = vsel %vm63, %v55, 0.0
    %v101 = vsel %vm63, %v56, 0.0
    %v102 = vadd.f32 %v100, %v101
    %v103 = vrot.slane %v102, 4
    %v104 = vadd.f32 %v102, %v103
    %v105 = vrot.slane %v104, 2
    %v106 = vadd.f32 %v104, %v105
    %v107 = vrot.slane %v106, 1
    %v108 = vadd.f32 %v106, %v107
    %v109 = vsel %vm63, %v57, 0.0
    %v110 = vsel %vm63, %v58, 0.0
    %v111 = vadd.f32 %v109, %v110
    %v112 = vrot.slane %v111, 4
    %v113 = vadd.f32 %v111, %v112
    %v114 = vrot.slane %v113, 2
    %v115 = vadd.f32 %v113, %v114
    %v116 = vrot.slane %v115, 1
    %v117 = vadd.f32 %v115, %v116
    %v118 = vsel %vm63, %v59, 0.0
    %v119 = vsel %vm63, %v60, 0.0
    %v120 = vadd.f32 %v118, %v119
    %v121 = vrot.slane %v120, 4
    %v122 = vadd.f32 %v120, %v121
    %v123 = vrot.slane %v122, 2
    %v124 = vadd.f32 %v122, %v123
    %v125 = vrot.slane %v124, 1
    %v126 = vadd.f32 %v124, %v125
    %v127 = vsel %vm63, %v61, 0.0
    %v128 = vsel %vm63, %v62, 0.0
    %v129 = vadd.f32 %v127, %v128
    %v130 = vrot.slane %v129, 4
    %v131 = vadd.f32 %v129, %v130
    %v132 = vrot.slane %v131, 2
    %v133 = vadd.f32 %v131, %v132
    %v134 = vrot.slane %v133, 1
    %v135 = vadd.f32 %v133, %v134
    %v136 = vrcp.pop 16.0
    %v137 = vmul.f32 %v72, %v136
    %v138 = vmul.f32 %v81, %v136
    %v139 = vmul.f32 %v90, %v136
    %v140 = vmul.f32 %v99, %v136
    %v141 = vmul.f32 %v108, %v136
    %v142 = vmul.f32 %v117, %v136
    %v143 = vmul.f32 %v126, %v136
    %v144 = vmul.f32 %v135, %v136
    %v145 = vpack.c.bf16 %v137, %v137
    %v146 = vpack.c.bf16 %v138, %v138
    %v147 = vpack.c.bf16 %v139, %v139
    %v148 = vpack.c.bf16 %v140, %v140
    %v149 = vpack.c.bf16 %v141, %v141
    %v150 = vpack.c.bf16 %v142, %v142
    %v151 = vpack.c.bf16 %v143, %v143
    %v152 = vpack.c.bf16 %v144, %v144
    %v153 = vld [vmem:[#allocation5] sm:$0xff]
    %v154 = vld [vmem:[#allocation5 + $0x8] sm:$0xff]
    %v155 = vld [vmem:[#allocation5 + $0x10] sm:$0xff]
    %v156 = vld [vmem:[#allocation5 + $0x18] sm:$0xff]
    %v157 = vld [vmem:[#allocation5 + $0x20] sm:$0xff]
    %v158 = vld [vmem:[#allocation5 + $0x28] sm:$0xff]
    %v159 = vld [vmem:[#allocation5 + $0x30] sm:$0xff]
    %v160 = vld [vmem:[#allocation5 + $0x38] sm:$0xff]
    %v161 = vld [vmem:[%s2] sm:$0x3]
    %v163 = vlaneseq
    %v164 = vshrl.u32 %v163, 7
    %v165 = vsub.s32 0, %v164
    %v166 = vrot.slane %v161, %v165
    %v167 = vlaneseq
    %v168 = vshrl.u32 %v167, 7
    %v169 = vsub.s32 1, %v168
    %v170 = vrot.slane %v161, %v169
    %v181 = vunpack.c.l.b16 %v145
    %v182 = vunpack.c.l.b16 %v146
    %v183 = vunpack.c.l.b16 %v147
    %v184 = vunpack.c.l.b16 %v148
    %v185 = vunpack.c.l.b16 %v149
    %v186 = vunpack.c.l.b16 %v150
    %v187 = vunpack.c.l.b16 %v151
    %v188 = vunpack.c.l.b16 %v152
    %vm189 = vcmask 1041409
    %v190 = vsel %vm189, %v182, %v181
    %vm191 = vcmask 1042434
    %v192 = vsel %vm191, %v183, %v190
    %vm193 = vcmask 1043459
    %v194 = vsel %vm193, %v184, %v192
    %vm195 = vcmask 1044484
    %v196 = vsel %vm195, %v185, %v194
    %vm197 = vcmask 1045509
    %v198 = vsel %vm197, %v186, %v196
    %vm199 = vcmask 1046534
    %v200 = vsel %vm199, %v187, %v198
    %vm201 = vcmask 1047559
    %v202 = vsel %vm201, %v188, %v200
    %v203 = vpack.c.b16 %v202, %v202
    %v212 = vunpack.c.l.b16 %v153
    %v213 = vunpack.c.h.b16 %v153
    %v214 = vunpack.c.l.b16 %v154
    %v215 = vunpack.c.h.b16 %v154
    %v216 = vunpack.c.l.b16 %v155
    %v217 = vunpack.c.h.b16 %v155
    %v218 = vunpack.c.l.b16 %v156
    %v219 = vunpack.c.h.b16 %v156
    %v220 = vunpack.c.l.b16 %v157
    %v221 = vunpack.c.h.b16 %v157
    %v222 = vunpack.c.l.b16 %v158
    %v223 = vunpack.c.h.b16 %v158
    %v224 = vunpack.c.l.b16 %v159
    %v225 = vunpack.c.h.b16 %v159
    %v226 = vunpack.c.l.b16 %v160
    %v227 = vunpack.c.h.b16 %v160
    %v228 = vpack.c.b16 %v214, %v212
    %v229 = vpack.c.b16 %v215, %v213
    %v230 = vpack.c.b16 %v218, %v216
    %v231 = vpack.c.b16 %v219, %v217
    %v232 = vpack.c.b16 %v222, %v220
    %v233 = vpack.c.b16 %v223, %v221
    %v234 = vpack.c.b16 %v226, %v224
    %v235 = vpack.c.b16 %v227, %v225
    %v245 = vsel %vm63, %v203, 0
    %247 = vmatprep.subr.bf16.mxu0 %v229
    %248 = vmatpush1.bf16.msra.mxu0 %v228
    %249 = vmatprep.subr.bf16.mxu0 %v231
    %250 = vmatpush1.bf16.msra.mxu0 %v230
    %251 = vmatprep.subr.bf16.mxu0 %v233
    %252 = vmatpush1.bf16.msra.mxu0 %v232
    %253 = vmatprep.subr.bf16.mxu0 %v235
    %254 = vmatpush1.bf16.msra.mxu0 %v234
    %255 = vmatprep.subr.bf16.mxu0 0
    %256 = vmatpush1.bf16.msra.mxu0 0
    %257 = vmatprep.subr.bf16.mxu0 0
    %258 = vmatpush1.bf16.msra.mxu0 0
    %259 = vmatprep.subr.bf16.mxu0 0
    %260 = vmatpush1.bf16.msra.mxu0 0
    %261 = vmatprep.subr.bf16.mxu0 0
    %262 = vmatpush1.bf16.msra.mxu0 0
    %263 = vmatprep.subr.bf16.mxu0 0
    %264 = vmatpush1.bf16.msra.mxu0 0
    %265 = vmatprep.subr.bf16.mxu0 0
    %266 = vmatpush1.bf16.msra.mxu0 0
    %267 = vmatprep.subr.bf16.mxu0 0
    %268 = vmatpush1.bf16.msra.mxu0 0
    %269 = vmatprep.subr.bf16.mxu0 0
    %270 = vmatpush1.bf16.msra.mxu0 0
    %271 = vmatprep.subr.bf16.mxu0 0
    %272 = vmatpush1.bf16.msra.mxu0 0
    %273 = vmatprep.subr.bf16.mxu0 0
    %274 = vmatpush1.bf16.msra.mxu0 0
    %275 = vmatprep.subr.bf16.mxu0 0
    %276 = vmatpush1.bf16.msra.mxu0 0
    %277 = vmatprep.subr.bf16.mxu0 0
    %278 = vmatpush1.bf16.msra.mxu0 0
    %279 = vmatprep.mubr.bf16.mxu0 0
    %280 = vmatmul.mubr.bf16.gmra.mrb[0].mxu0 %v245
    %v281 = vpop.f32.mrb[0].mxu0
    %v282 = vadd.f32 %v166, %v281
    %v283 = vpop.f32.mrb[0].mxu0
    %v284 = vadd.f32 %v170, %v283
    %v285 = vpop.f32.mrb[0].mxu0
    %v286 = vpop.f32.mrb[0].mxu0
    %287 = vdwg.mxu0
    %288 = vst [vmem:[#allocation7] sm:$0xff] %v282
    %289 = vst [vmem:[#allocation8] sm:$0xff] %v284
    // Predicated region
    $region22: #{tpu_custom_call.1} parent=1 // pred_check
      _
    $region23: #{tpu_custom_call.1} parent=1 // pred_check_branch
      %291 = sbr.rel (0) target = $region25
    $region24: #{tpu_custom_call.1} parent=1 // pred_region
      %s293 = ssub.s32 128, 128
      %294 = vsyncadd [#allocation4], %s293
      %s296 = sshll.u32 [#allocation7], 4
      %s297 = int_to_ptr.vmem [resolvable:$true] %s296
      %299 = dma.vmem_to_hbm [thread:$0]  %s297, 128, %s3, [#allocation4]
    $region25: #{tpu_custom_call.1} parent=1 // pred_fallthru
      _
    // Predicated region
    $region26: #{tpu_custom_call.1} parent=1 // pred_check
      _
    $region27: #{tpu_custom_call.1} parent=1 // pred_check_branch
      %301 = sbr.rel (0) target = $region29
    $region28: #{tpu_custom_call.1} parent=1 // pred_region
      %s303 = ssub.s32 128, 128
      %304 = vsyncadd [#allocation9], %s303
      %s306 = sshll.u32 [#allocation8], 4
      %s307 = int_to_ptr.vmem [resolvable:$true] %s306
      %309 = dma.vmem_to_hbm [thread:$0]  %s307, 128, %s4, [#allocation9]
    $region29: #{tpu_custom_call.1} parent=1 // pred_fallthru
      _
    // Predicated region
    $region30: #{tpu_custom_call.1} parent=1 // pred_check
      _
    $region31: #{tpu_custom_call.1} parent=1 // pred_check_branch
      %311 = sbr.rel (0) target = $region33
    $region32: #{tpu_custom_call.1} parent=1 // pred_region
      %312 = dma.done [#allocation4], 128
    $region33: #{tpu_custom_call.1} parent=1 // pred_fallthru
      _
    // Predicated region
    $region34: #{tpu_custom_call.1} parent=1 // pred_check
      _
    $region35: #{tpu_custom_call.1} parent=1 // pred_check_branch
      %314 = sbr.rel (0) target = $region37
    $region36: #{tpu_custom_call.1} parent=1 // pred_region
      %315 = dma.done [#allocation9], 128
    $region37: #{tpu_custom_call.1} parent=1 // pred_fallthru
      _
    %316 = vsyncpa [#allocation3], 1
    %317 = vsyncpa [#allocation6], 1
    %318 = vsyncpa [#allocation4], 1
    %319 = vsyncpa [#allocation9], 1

</llo_original>
